<compile_context>
chip_gen: v7x
topology: tpu7x:2x2x1
jax: 0.10.0
libtpu: 0.0.40
codegen_flags: <defaults>
</compile_context>

<pallas_src>
import functools

import jax
import jax.numpy as jnp
from jax import lax
from jax.experimental import pallas as pl
from jax.experimental.pallas import tpu as pltpu


def _percs_kernel(thres_ref, src_ref, tar_ref, count_ref, *, tile_n, n_valid):
    j = pl.program_id(1)
    num_inner = pl.num_programs(1)

    # Init the int32 accumulator block once per outer index.
    @pl.when(j == 0)
    def _():
        count_ref[...] = jnp.zeros_like(count_ref)

    src = src_ref[...].astype(jnp.float32)
    tar = tar_ref[...].astype(jnp.float32)
    diff = jnp.abs(src - tar)                      # VPU elementwise
    thres = thres_ref[...]                         # (B, 1) f32, lane-broadcast

    # Mask out the padded tail of the last (ragged) feature chunk.
    chunk = pl.program_id(0) * num_inner + j
    col = lax.broadcasted_iota(jnp.int32, diff.shape, 1) + chunk * tile_n
    hits = jnp.logical_and(diff < thres, col < n_valid)   # strict '<' like torch

    # Exact integer accumulation (no f32 precision loss past 2^24 hits).
    count_ref[...] += jnp.sum(hits.astype(jnp.int32))


def _choose_tile_n(batch, n_feat, itemsize):
    # Keep (2 inputs x 2 double-buffers x tile) comfortably under the tightest
    # scoped-VMEM default (16 MiB on v5e); cap lanes so per-step tiles stay
    # a few MiB (HBM-roofline regime, ~0.35 us/step overhead amortized).
    budget_bytes = 8 * 1024 * 1024
    per_lane_bytes = 2 * 2 * batch * itemsize
    max_tile = max(128, budget_bytes // per_lane_bytes)
    tile = min(n_feat, 8192, max_tile)
    return max(128, (tile // 128) * 128)


def percs(src, tar):
    """PerCS.forward equivalent. src, tar: (B, C, H, W). Returns pcs scalar (f32)."""
    assert src.shape == tar.shape
    b = tar.shape[0]
    n_elem = tar.size
    n_feat = n_elem // b

    # Keep native dtype through the BlockSpec (no extra HBM astype pass).
    src2d = src.reshape(b, n_feat)
    tar2d = tar.reshape(b, n_feat)

    # Per-batch max -> threshold, computed once; tiny (B, 1) f32 side input.
    max_values = jnp.max(tar2d, axis=1, keepdims=True)
    thres2d = (max_values * 0.025).astype(jnp.float32)

    itemsize = jnp.dtype(tar2d.dtype).itemsize
    tile_n = _choose_tile_n(b, n_feat, itemsize)
    num_chunks = pl.cdiv(n_feat, tile_n)
    # Outer "parallel" axis (megacore on v7x) only when it divides the chunks.
    num_outer = 2 if (num_chunks >= 2 and num_chunks % 2 == 0) else 1
    num_inner = num_chunks // num_outer

    kernel = functools.partial(_percs_kernel, tile_n=tile_n, n_valid=n_feat)

    counts = pl.pallas_call(
        kernel,
        out_shape=jax.ShapeDtypeStruct((num_outer, 1, 1), jnp.int32),
        grid=(num_outer, num_inner),
        in_specs=[
            pl.BlockSpec((b, 1), lambda i, j: (0, 0)),                        # thresholds (resident)
            pl.BlockSpec((b, tile_n), lambda i, j: (0, i * num_inner + j)),   # src stream
            pl.BlockSpec((b, tile_n), lambda i, j: (0, i * num_inner + j)),   # tar stream
        ],
        out_specs=pl.BlockSpec((1, 1, 1), lambda i, j: (i, 0, 0)),
        compiler_params=pltpu.CompilerParams(
            dimension_semantics=("parallel", "arbitrary")),
        cost_estimate=pl.CostEstimate(
            flops=3 * n_elem,
            transcendentals=0,
            bytes_accessed=2 * n_elem * itemsize),
    )(thres2d, src2d, tar2d)

    # Glue: tiny partial-sum + normalization by numel (matches count / numel).
    total = jnp.sum(counts)
    return total.astype(jnp.float32) / jnp.float32(n_elem)


if __name__ == "__main__":
    key = jax.random.PRNGKey(0)
    k_src, k_tar = jax.random.split(key)

    B, C, H, W = 2, 4, 16, 16
    src = jax.random.normal(k_src, (B, C, H, W), dtype=jnp.float32)
    tar = jax.random.normal(k_tar, (B, C, H, W), dtype=jnp.float32)

    pcs = percs(src, tar)
    jax.block_until_ready(pcs)

    # Pure-JAX reference (mirrors the PyTorch forward exactly).
    diff = jnp.abs(src - tar)
    max_values = jnp.max(tar.reshape(B, -1), axis=1)
    thres = max_values[:, None, None, None] * 0.025
    ref = jnp.sum(diff < thres) / tar.size

    assert abs(float(pcs) - float(ref)) < 1e-6, (float(pcs), float(ref))
    print("KERNEL_OK")
</pallas_src>

<mosaic_0001>
module attributes {stable_mosaic.version = 11 : i64} {
  func.func @_percs_kernel(%arg0: i32, %arg1: i32, %arg2: memref<2x1xf32, #tpu.memory_space<vmem>>, %arg3: memref<2x1024xf32, #tpu.memory_space<vmem>>, %arg4: memref<2x1024xf32, #tpu.memory_space<vmem>>, %arg5: memref<1x1x1xi32, #tpu.memory_space<vmem>>) attributes {dimension_semantics = [#tpu.dimension_semantics<parallel>, #tpu.dimension_semantics<arbitrary>], iteration_bounds = array<i64: 1, 1>, scalar_prefetch = 0 : i64, scratch_operands = 0 : i64, tpu.core_type = #tpu.core_type<tc>, window_params = [{pipeline_mode = #tpu.pipeline_mode<synchronous>, transform_indices = @transform_0, window_bounds = array<i64: 2, 1>}, {transform_indices = @transform_1, window_bounds = array<i64: 2, 1024>}, {transform_indices = @transform_2, window_bounds = array<i64: 2, 1024>}, {transform_indices = @transform_3, window_bounds = array<i64: 1, 1, 1>}]} {
    %c0_i32 = arith.constant 0 : i32
    %0 = arith.cmpi eq, %arg1, %c0_i32 : i32
    %1 = arith.extui %0 : i1 to i32
    %c0_i32_0 = arith.constant 0 : i32
    %2 = arith.cmpi ne, %1, %c0_i32_0 : i32
    scf.if %2 {
      %c0_i32_13 = arith.constant 0 : i32
      %28 = vector.broadcast %c0_i32_13 : i32 to vector<1x1x1xi32>
      %c0_14 = arith.constant 0 : index
      %c0_15 = arith.constant 0 : index
      %c0_16 = arith.constant 0 : index
      %29 = vector.load %arg5[%c0_14, %c0_15, %c0_16] : memref<1x1x1xi32, #tpu.memory_space<vmem>>, vector<1x1x1xi32>
      tpu.vector_store %arg5[%c0_14, %c0_15, %c0_16], %28 {strides = array<i32>} : memref<1x1x1xi32, #tpu.memory_space<vmem>>, vector<1x1x1xi32>,
    } else {
    }
    %c0 = arith.constant 0 : index
    %c0_1 = arith.constant 0 : index
    %3 = vector.load %arg3[%c0, %c0_1] : memref<2x1024xf32, #tpu.memory_space<vmem>>, vector<2x1024xf32>
    %c0_2 = arith.constant 0 : index
    %c0_3 = arith.constant 0 : index
    %4 = vector.load %arg4[%c0_2, %c0_3] : memref<2x1024xf32, #tpu.memory_space<vmem>>, vector<2x1024xf32>
    %5 = arith.subf %3, %4 : vector<2x1024xf32>
    %6 = math.absf %5 : vector<2x1024xf32>
    %c0_4 = arith.constant 0 : index
    %c0_5 = arith.constant 0 : index
    %7 = vector.load %arg2[%c0_4, %c0_5] : memref<2x1xf32, #tpu.memory_space<vmem>>, vector<2x1xf32>
    %c1_i32 = arith.constant 1 : i32
    %8 = arith.muli %arg0, %c1_i32 : i32
    %9 = arith.addi %8, %arg1 : i32
    %10 = tpu.iota {dimensions = array<i32: 1>} : vector<2x1024xi32>
    %c1024_i32 = arith.constant 1024 : i32
    %11 = arith.muli %9, %c1024_i32 : i32
    %12 = vector.broadcast %11 : i32 to vector<2x1024xi32>
    %13 = arith.addi %10, %12 : vector<2x1024xi32>
    %14 = vector.broadcast %7 : vector<2x1xf32> to vector<2x1024xf32>
    %15 = arith.cmpf olt, %6, %14 : vector<2x1024xf32>
    %c1024_i32_6 = arith.constant 1024 : i32
    %16 = vector.broadcast %c1024_i32_6 : i32 to vector<2x1024xi32>
    %17 = arith.cmpi slt, %13, %16 : vector<2x1024xi32>
    %18 = arith.andi %15, %17 : vector<2x1024xi1>
    %c0_7 = arith.constant 0 : index
    %c0_8 = arith.constant 0 : index
    %c0_9 = arith.constant 0 : index
    %19 = vector.load %arg5[%c0_7, %c0_8, %c0_9] : memref<1x1x1xi32, #tpu.memory_space<vmem>>, vector<1x1x1xi32>
    %20 = arith.extui %18 : vector<2x1024xi1> to vector<2x1024xi32>
    %21 = vector.shape_cast %20 : vector<2x1024xi32> to vector<1x2x1024xi32>
    %cst = arith.constant dense<0> : vector<1xi32>
    %22 = vector.multi_reduction <add>, %21, %cst [1, 2] : vector<1x2x1024xi32> to vector<1xi32>
    %23 = vector.shape_cast %22 : vector<1xi32> to vector<1x1x1xi32>
    %24 = vector.extract %23[0, 0, 0] : i32 from vector<1x1x1xi32>
    %25 = vector.broadcast %24 : i32 to vector<1x1x1xi32>
    %26 = arith.addi %19, %25 : vector<1x1x1xi32>
    %c0_10 = arith.constant 0 : index
    %c0_11 = arith.constant 0 : index
    %c0_12 = arith.constant 0 : index
    %27 = vector.load %arg5[%c0_10, %c0_11, %c0_12] : memref<1x1x1xi32, #tpu.memory_space<vmem>>, vector<1x1x1xi32>
    tpu.vector_store %arg5[%c0_10, %c0_11, %c0_12], %26 {strides = array<i32>} : memref<1x1x1xi32, #tpu.memory_space<vmem>>, vector<1x1x1xi32>,
    return
  }
  func.func @transform_0(%arg0: i32, %arg1: i32) -> (i32, i32) {
    %c0_i32 = arith.constant 0 : i32
    %c0_i32_0 = arith.constant 0 : i32
    %c0_i32_1 = arith.constant 0 : i32
    return %c0_i32, %c0_i32_0 : i32, i32
  }
  func.func @transform_1(%arg0: i32, %arg1: i32) -> (i32, i32) {
    %c1_i32 = arith.constant 1 : i32
    %0 = arith.muli %arg0, %c1_i32 : i32
    %1 = arith.addi %0, %arg1 : i32
    %c0_i32 = arith.constant 0 : i32
    %c0_i32_0 = arith.constant 0 : i32
    return %c0_i32, %1 : i32, i32
  }
  func.func @transform_2(%arg0: i32, %arg1: i32) -> (i32, i32) {
    %c1_i32 = arith.constant 1 : i32
    %0 = arith.muli %arg0, %c1_i32 : i32
    %1 = arith.addi %0, %arg1 : i32
    %c0_i32 = arith.constant 0 : i32
    %c0_i32_0 = arith.constant 0 : i32
    return %c0_i32, %1 : i32, i32
  }
  func.func @transform_3(%arg0: i32, %arg1: i32) -> (i32, i32, i32) {
    %c0_i32 = arith.constant 0 : i32
    %c0_i32_0 = arith.constant 0 : i32
    %c0_i32_1 = arith.constant 0 : i32
    return %arg0, %c0_i32, %c0_i32_0 : i32, i32, i32
  }
}

</mosaic_0001>

<llo_original>
// kernel: tpu_custom_call.1
$region0: #{tpu_custom_call.1}
  #allocation0 [shape = 'u32[]', space=smem, size = 0x4, offset = 0x4, fixed_abs, tag = 'smem constant byte address 0x4 - core index']
  #allocation1 [shape = 'u32[144,128]{1,0:T(1,128)}', space=vmem, size = 0x12000, scoped, tag = 'internal scratch']
  %s0 = inlined_call_operand.vmem [shape: f32[2,1], index: 0, kind: input, shape index: {}]
  %s1 = inlined_call_operand.hbm [shape: f32[2,1024], index: 1, kind: input, shape index: {}]
  %s2 = inlined_call_operand.hbm [shape: f32[2,1024], index: 2, kind: input, shape index: {}]
  %s3 = inlined_call_operand.hbm [shape: s32[1,1,1], index: 3, kind: output, shape index: {}]
  %s4 = sld [smem:[#allocation0]]
  $region34: #{tpu_custom_call.1} parent=0
    _
  %s6 = ssub.s32 1, %s4
  %s7 = scalar_select 0, %s6, %s4
  $region1: #{tpu_custom_call.1} parent=0
    #allocation2 [shape = 'u8[8192]{0}', space=vmem, size = 0x2000, scoped, tag = 'input window, operand 1, single buffered']
    #allocation3 [shape = 's32[1]{0}', space=sflag, size = 0x4, scoped, tag = 'scoped memory for tpu_custom_call.1']
    #allocation4 [shape = 's32[1]{0}', space=sflag, size = 0x4, scoped, tag = 'scoped memory for tpu_custom_call.1']
    #allocation5 [shape = 'u8[8192]{0}', space=vmem, size = 0x2000, scoped, tag = 'input window, operand 2, single buffered']
    #allocation6 [shape = 's32[1]{0}', space=sflag, size = 0x4, scoped, tag = 'scoped memory for tpu_custom_call.1']
    #allocation7 [shape = 'u8[512]{0}', space=vmem, size = 0x400, scoped, tag = 'output window, operand 0, single buffered']
    %8 = vsyncpa [#allocation3], 0
    %9 = vsyncpa [#allocation6], 0
    %10 = vsyncpa [#allocation4], 0
    // Predicated region
    $region2: #{tpu_custom_call.1} parent=1 // pred_check
      _
    $region3: #{tpu_custom_call.1} parent=1 // pred_check_branch
      %12 = sbr.rel (0) target = $region5
    $region4: #{tpu_custom_call.1} parent=1 // pred_region
      _
    $region5: #{tpu_custom_call.1} parent=1 // pred_fallthru
      _
    // Predicated region
    $region6: #{tpu_custom_call.1} parent=1 // pred_check
      _
    $region7: #{tpu_custom_call.1} parent=1 // pred_check_branch
      %14 = sbr.rel (0) target = $region9
    $region8: #{tpu_custom_call.1} parent=1 // pred_region
      %s15 = sadd.s32 0, 0
      %s16 = smul.u32 8, %s15
      %s18 = ssub.s32 256, 256
      %19 = vsyncadd [#allocation3], %s18
      %s20 = smul.addr %s16, 32
      %s21 = scalar_lea.hbm %s1, %s20
      %s23 = sshll.u32 [#allocation2], 4
      %s24 = int_to_ptr.vmem [resolvable:$true] %s23
      %26 = dma.hbm_to_vmem [thread:$0]  %s21, 256, %s24, [#allocation3]
    $region9: #{tpu_custom_call.1} parent=1 // pred_fallthru
      _
    // Predicated region
    $region10: #{tpu_custom_call.1} parent=1 // pred_check
      _
    $region11: #{tpu_custom_call.1} parent=1 // pred_check_branch
      %28 = sbr.rel (0) target = $region13
    $region12: #{tpu_custom_call.1} parent=1 // pred_region
      %s29 = sadd.s32 0, 0
      %s30 = smul.u32 8, %s29
      %s32 = ssub.s32 256, 256
      %33 = vsyncadd [#allocation6], %s32
      %s34 = smul.addr %s30, 32
      %s35 = scalar_lea.hbm %s2, %s34
      %s37 = sshll.u32 [#allocation5], 4
      %s38 = int_to_ptr.vmem [resolvable:$true] %s37
      %40 = dma.hbm_to_vmem [thread:$0]  %s35, 256, %s38, [#allocation6]
    $region13: #{tpu_custom_call.1} parent=1 // pred_fallthru
      _
    // Predicated region
    $region14: #{tpu_custom_call.1} parent=1 // pred_check
      _
    $region15: #{tpu_custom_call.1} parent=1 // pred_check_branch
      %42 = sbr.rel (0) target = $region17
    $region16: #{tpu_custom_call.1} parent=1 // pred_region
      %43 = dma.done [#allocation3], 256
    $region17: #{tpu_custom_call.1} parent=1 // pred_fallthru
      _
    // Predicated region
    $region18: #{tpu_custom_call.1} parent=1 // pred_check
      _
    $region19: #{tpu_custom_call.1} parent=1 // pred_check_branch
      %45 = sbr.rel (0) target = $region21
    $region20: #{tpu_custom_call.1} parent=1 // pred_region
      %46 = dma.done [#allocation6], 256
    $region21: #{tpu_custom_call.1} parent=1 // pred_fallthru
      _
    %s47 = sadd.s32 0, 0
    %s48 = smul.u32 8, %s47
    %s49 = sadd.s32 0, 0
    %s50 = smul.u32 8, %s49
    %p51 = scmp.eq.s32.totalorder 0, 0
    // Predicated region
    $region22: #{tpu_custom_call.1} parent=1 // pred_check
      %p52 = pneg %p51
    $region23: #{tpu_custom_call.1} parent=1 // pred_check_branch
      %54 = sbr.rel (%p52) target = $region25
    $region24: #{tpu_custom_call.1} parent=1 // pred_region
      %vm55 = vcmask 0
      %56 = vst.msk [vmem:[#allocation7] sm:$0x1] %vm55, 0
    $region25: #{tpu_custom_call.1} parent=1 // pred_fallthru
      _
    %v57 = vld [vmem:[#allocation2] sm:$0xff]
    %v58 = vld [vmem:[#allocation2 + $0x8] sm:$0xff]
    %v59 = vld [vmem:[#allocation5] sm:$0xff]
    %v60 = vld [vmem:[#allocation5 + $0x8] sm:$0xff]
    %v61 = vsub.f32 %v57, %v59
    %v62 = vsub.f32 %v58, %v60
    %v63 = vand.u32 2147483647, %v61
    %v64 = vand.u32 2147483647, %v62
    %v65 = vld [vmem:[%s0] sm:$0x3]
    %s66 = sadd.s32 0, 0
    %v67 = vlaneseq
    %v68 = vand.u32 %v67, 127
    %v69 = vadd.s32 %v68, 128
    %v70 = vadd.s32 %v68, 256
    %v71 = vadd.s32 %v68, 384
    %v72 = vadd.s32 %v68, 512
    %v73 = vadd.s32 %v68, 640
    %v74 = vadd.s32 %v68, 768
    %v75 = vadd.s32 %v68, 896
    %s76 = smul.u32 %s66, 1024
    %v77 = vstv %s76
    %v78 = vadd.s32 %v68, %v77
    %v79 = vadd.s32 %v69, %v77
    %v80 = vadd.s32 %v70, %v77
    %v81 = vadd.s32 %v71, %v77
    %v82 = vadd.s32 %v72, %v77
    %v83 = vadd.s32 %v73, %v77
    %v84 = vadd.s32 %v74, %v77
    %v85 = vadd.s32 %v75, %v77
    %87 = vset.pattern.permute.xlu0 0
    %88 = vperm.xlu0 %87, %v65
    %v89 = vpop.permute.xlu0 %88
    %v91 = vunpack.c.l.s4 269488144
    %v92 = vunpack.c.0.s8 %v91
    %v93 = vlaneseq
    %v94 = vshrl.u32 %v93, 7
    %v95 = vsub.s32 %v92, %v94
    %v96 = vrot.slane %v89, %v95
    %vm98 = vcmp.lt.f32.partialorder %v63, %v96
    %vm99 = vcmp.lt.f32.partialorder %v64, %v96
    %vm100 = vcmp.lt.s32.totalorder %v78, 1024
    %vm101 = vcmp.lt.s32.totalorder %v79, 1024
    %vm102 = vcmp.lt.s32.totalorder %v80, 1024
    %vm103 = vcmp.lt.s32.totalorder %v81, 1024
    %vm104 = vcmp.lt.s32.totalorder %v82, 1024
    %vm105 = vcmp.lt.s32.totalorder %v83, 1024
    %vm106 = vcmp.lt.s32.totalorder %v84, 1024
    %vm107 = vcmp.lt.s32.totalorder %v85, 1024
    %v108 = vsel %vm100, 1, 0
    %v109 = vsel %vm101, 1, 0
    %v110 = vsel %vm102, 1, 0
    %v111 = vsel %vm103, 1, 0
    %v112 = vsel %vm104, 1, 0
    %v113 = vsel %vm105, 1, 0
    %v114 = vsel %vm106, 1, 0
    %v115 = vsel %vm107, 1, 0
    %v116 = vcombine.low %v108, %v109
    %v117 = vcombine.low %v110, %v111
    %v119 = vunpack.c.l.s4 1983009808
    %v120 = vunpack.c.0.s8 %v119
    %v121 = vlaneseq
    %v122 = vshrl.u32 %v121, 7
    %v123 = vsub.s32 %v120, %v122
    %v124 = vrot.slane %v116, %v123
    %v126 = vunpack.c.l.s4 1983009808
    %v127 = vunpack.c.0.s8 %v126
    %v128 = vlaneseq
    %v129 = vshrl.u32 %v128, 7
    %v130 = vsub.s32 %v127, %v129
    %v131 = vrot.slane %v117, %v130
    %v132 = vcombine.low %v124, %v131
    %v133 = vcombine.low %v112, %v113
    %v134 = vcombine.low %v114, %v115
    %v136 = vunpack.c.l.s4 1983009808
    %v137 = vunpack.c.0.s8 %v136
    %v138 = vlaneseq
    %v139 = vshrl.u32 %v138, 7
    %v140 = vsub.s32 %v137, %v139
    %v141 = vrot.slane %v133, %v140
    %v143 = vunpack.c.l.s4 1983009808
    %v144 = vunpack.c.0.s8 %v143
    %v145 = vlaneseq
    %v146 = vshrl.u32 %v145, 7
    %v147 = vsub.s32 %v144, %v146
    %v148 = vrot.slane %v134, %v147
    %v149 = vcombine.low %v141, %v148
    %vm150 = vcmp.ne.s32.totalorder %v132, 0
    %vm151 = vcmp.ne.s32.totalorder %v149, 0
    %vm152 = vmand %vm98, %vm150
    %vm153 = vmand %vm99, %vm151
    %v154 = vld [vmem:[#allocation7] sm:$0x1]
    %v155 = vsel %vm152, 1, 0
    %v156 = vsel %vm153, 1, 0
    %v157 = vcombine.high %v155, %v155
    %v159 = vunpack.c.l.s4 1983009808
    %v160 = vunpack.c.0.s8 %v159
    %v161 = vlaneseq
    %v162 = vshrl.u32 %v161, 7
    %v163 = vsub.s32 %v160, %v162
    %v164 = vrot.slane %v155, %v163
    %v166 = vunpack.c.l.s4 1983009808
    %v167 = vunpack.c.0.s8 %v166
    %v168 = vlaneseq
    %v169 = vshrl.u32 %v168, 7
    %v170 = vsub.s32 %v167, %v169
    %v171 = vrot.slane %v157, %v170
    %v172 = vcombine.high %v164, %v164
    %v173 = vcombine.high %v171, %v171
    %v174 = vcombine.high %v156, %v156
    %v176 = vunpack.c.l.s4 1983009808
    %v177 = vunpack.c.0.s8 %v176
    %v178 = vlaneseq
    %v179 = vshrl.u32 %v178, 7
    %v180 = vsub.s32 %v177, %v179
    %v181 = vrot.slane %v156, %v180
    %v183 = vunpack.c.l.s4 1983009808
    %v184 = vunpack.c.0.s8 %v183
    %v185 = vlaneseq
    %v186 = vshrl.u32 %v185, 7
    %v187 = vsub.s32 %v184, %v186
    %v188 = vrot.slane %v174, %v187
    %v189 = vcombine.high %v181, %v181
    %v190 = vcombine.high %v188, %v188
    %vm191 = vcmask 1041408
    %v192 = vsel %vm191, %v164, 0
    %v193 = vsel %vm191, %v172, 0
    %v194 = vsel %vm191, %v171, 0
    %v195 = vsel %vm191, %v173, 0
    %v196 = vsel %vm191, %v181, 0
    %v197 = vadd.s32 %v192, %v196
    %v198 = vsel %vm191, %v189, 0
    %v199 = vadd.s32 %v193, %v198
    %v200 = vsel %vm191, %v188, 0
    %v201 = vadd.s32 %v194, %v200
    %v202 = vsel %vm191, %v190, 0
    %v203 = vadd.s32 %v195, %v202
    %v204 = vadd.s32 %v197, %v199
    %v205 = vadd.s32 %v201, %v203
    %v206 = vadd.s32 %v204, %v205
    %v207 = vand.u32 %v206, 65535
    %v208 = vshrl.u32 %v206, 16
    %v209 = vcvt.s32.f32 %v207
    %v210 = vcvt.s32.f32 %v208
    %211 = vadd.xlane.f32.xlu0 %v209
    %v212 = vpop.xlane.xlu0 %211
    %213 = vadd.xlane.f32.xlu0 %v210
    %v214 = vpop.xlane.xlu0 %213
    %v215 = vcvt.f32.s32 %v212
    %v216 = vcvt.f32.s32 %v214
    %v217 = vshll.u32 %v216, 16
    %v218 = vadd.s32 %v217, %v215
    %v219 = vrot.slane %v218, 4
    %v220 = vadd.s32 %v218, %v219
    %v221 = vrot.slane %v220, 2
    %v222 = vadd.s32 %v220, %v221
    %v223 = vrot.slane %v222, 1
    %v224 = vadd.s32 %v222, %v223
    %s225 = vtos %v224
    %v226 = vstv %s225
    %v227 = vadd.s32 %v154, %v226
    %vm228 = vcmask 0
    %229 = vst.msk [vmem:[#allocation7] sm:$0x1] %vm228, %v227
    // Predicated region
    $region26: #{tpu_custom_call.1} parent=1 // pred_check
      _
    $region27: #{tpu_custom_call.1} parent=1 // pred_check_branch
      %231 = sbr.rel (0) target = $region29
    $region28: #{tpu_custom_call.1} parent=1 // pred_region
      %s233 = ssub.s32 16, 16
      %234 = vsyncadd [#allocation4], %s233
      %s236 = sshll.u32 [#allocation7], 4
      %s237 = int_to_ptr.vmem [resolvable:$true] %s236
      %239 = dma.vmem_to_hbm [thread:$0]  %s237, 16, %s3, [#allocation4]
    $region29: #{tpu_custom_call.1} parent=1 // pred_fallthru
      _
    // Predicated region
    $region30: #{tpu_custom_call.1} parent=1 // pred_check
      _
    $region31: #{tpu_custom_call.1} parent=1 // pred_check_branch
      %241 = sbr.rel (0) target = $region33
    $region32: #{tpu_custom_call.1} parent=1 // pred_region
      %242 = dma.done [#allocation4], 16
    $region33: #{tpu_custom_call.1} parent=1 // pred_fallthru
      _
    %243 = vsyncpa [#allocation3], 1
    %244 = vsyncpa [#allocation6], 1
    %245 = vsyncpa [#allocation4], 1

</llo_original>
